<compile_context>
chip_gen: v7x
topology: tpu7x:2x2x1
jax: 0.10.0
libtpu: 0.0.40
codegen_flags: <defaults>
</compile_context>

<pallas_src>
import functools
import math

import jax
import jax.numpy as jnp
import numpy as np
from jax.experimental import pallas as pl
from jax.experimental.pallas import tpu as pltpu

_LANES = 128
_SUBLANES = 8
# Budget for the double-buffered (t block + out block) pair.  Keeps total resident
# VMEM ~<= 20 MiB, comfortably inside v7x's 64 MiB physical / 32 MiB default scope.
_BLOCK_BYTE_BUDGET = 16 << 20


def _time_encode_kernel(t_ref, w_ref, o_ref, *, pack):
    # t_ref: (tile_r, pack), w_ref: (pack, lane_width), o_ref: (tile_r, lane_width)
    t = t_ref[...]
    w = w_ref[...]
    acc = t[:, 0:1] * w[0:1, :]
    for j in range(1, pack):
        acc = acc + t[:, j:j + 1] * w[j:j + 1, :]
    o_ref[...] = jnp.cos(acc).astype(o_ref.dtype)


def _time_encode_bias_kernel(t_ref, w_ref, b_ref, o_ref, *, pack):
    # Same as above, plus a (1, lane_width) bias row added inside the cos().
    t = t_ref[...]
    w = w_ref[...]
    acc = b_ref[...] + t[:, 0:1] * w[0:1, :]
    for j in range(1, pack):
        acc = acc + t[:, j:j + 1] * w[j:j + 1, :]
    o_ref[...] = jnp.cos(acc).astype(o_ref.dtype)


def make_time_encode_params(dimension: int):
    # Deterministic init, matching the PyTorch module's __init__.
    w = (1.0 / 10.0 ** np.linspace(0, 9, dimension)).astype(np.float32)  # (D,)
    b = np.zeros((dimension,), dtype=np.float32)                          # (D,)
    return jnp.asarray(w), jnp.asarray(b)


def _round_up(x, m):
    return ((x + m - 1) // m) * m


def _choose_pack(D):
    """pack = 128 / gcd(D, 128): smallest row fold making pack*D a multiple of 128."""
    g = math.gcd(D, _LANES)
    pack = _LANES // g
    lane_width = pack * D
    if pack > 1 and (lane_width > 2048 or pack > 64):
        return 1, D        # awkward D: fall back to lane-sparse (masked) stores
    return pack, lane_width


def _expand_weights(w, pack):
    """Block-diagonal (pack, pack*D) slab: w_exp[j, k*D+d] = (j==k) * w[d]."""
    D = int(w.shape[0])
    wf = w.reshape(1, D).astype(jnp.float32)
    if pack == 1:
        return wf
    eye = jnp.eye(pack, dtype=jnp.float32)
    return (eye[:, :, None] * wf[None, :, :]).reshape(pack, pack * D)


def time_encode(t, w, b=None, *, tile_rows=8192, out_dtype=jnp.float32):
    """t: (B, S) -> (B, S, D) with out[b,s,d] = cos(t[b,s]*w[d] (+ b[d]))."""
    B, S = t.shape
    D = int(w.shape[0])
    N = B * S
    use_bias = b is not None

    pack, lane_width = _choose_pack(D)

    # Rows of the lane-dense (rows, lane_width) output view.  Rounded to a sublane
    # multiple so every block stays (8,128)-aligned; pads at most 8*pack-1 elements,
    # and the out[:N] slice below only triggers when N % (8*pack) != 0.
    rows = _round_up(-(-N // pack), _SUBLANES)
    n_pad = rows * pack

    out_itemsize = jnp.dtype(out_dtype).itemsize
    # VMEM bytes per block row (double-buffered).  The (tile_r, pack) t block is
    # lane-padded to a full 128-lane row in VMEM, so budget it at 128 lanes.
    t_row_bytes = _round_up(pack, _LANES) * 4
    out_row_bytes = lane_width * out_itemsize
    max_rows_vmem = max(_SUBLANES,
                        _BLOCK_BYTE_BUDGET // (2 * (t_row_bytes + out_row_bytes)))

    tile_r = max(_SUBLANES,
                 (min(tile_rows, max_rows_vmem) // _SUBLANES) * _SUBLANES)
    # Guarantee >= 2 grid steps when possible so the parallel axis can shard
    # across both TensorCores on v7x.
    tile_r = min(tile_r, _round_up(-(-rows // 2), _SUBLANES))
    tile_r = min(tile_r, rows)
    grid = -(-rows // tile_r)

    t_flat = t.reshape(N).astype(jnp.float32)
    if n_pad != N:
        t_flat = jnp.pad(t_flat, (0, n_pad - N))
    t_in = t_flat.reshape(rows, pack)

    w_exp = _expand_weights(w, pack)                                       # (pack, lane_width)

    inputs = [t_in, w_exp]
    in_specs = [
        pl.BlockSpec((tile_r, pack), lambda i: (i, 0)),
        pl.BlockSpec((pack, lane_width), lambda i: (0, 0)),                # resident
    ]
    if use_bias:
        b_row = jnp.tile(b.reshape(1, D).astype(jnp.float32), (1, pack))   # (1, lane_width)
        inputs.append(b_row)
        in_specs.append(pl.BlockSpec((1, lane_width), lambda i: (0, 0)))   # resident
        kernel = functools.partial(_time_encode_bias_kernel, pack=pack)
    else:
        kernel = functools.partial(_time_encode_kernel, pack=pack)

    vmem_needed = 2 * tile_r * (t_row_bytes + out_row_bytes) + (4 << 20)
    vmem_limit = int(min(max(vmem_needed, 32 << 20), 64 << 20))

    cost = pl.CostEstimate(
        flops=rows * lane_width * (2 * pack - 1 + (1 if use_bias else 0)),
        transcendentals=rows * lane_width,
        bytes_accessed=(rows * lane_width * out_itemsize
                        + 4 * n_pad + 4 * pack * lane_width
                        + (4 * lane_width if use_bias else 0)),
    )

    out = pl.pallas_call(
        kernel,
        out_shape=jax.ShapeDtypeStruct((rows, lane_width), out_dtype),
        grid_spec=pltpu.PrefetchScalarGridSpec(
            num_scalar_prefetch=0,
            grid=(grid,),
            in_specs=in_specs,
            out_specs=pl.BlockSpec((tile_r, lane_width), lambda i: (i, 0)),
        ),
        compiler_params=pltpu.CompilerParams(
            dimension_semantics=("parallel",),
            vmem_limit_bytes=vmem_limit),
        cost_estimate=cost,
    )(*inputs)

    out = out.reshape(n_pad, D)
    if n_pad != N:
        out = out[:N]
    return out.reshape(B, S, D)


if __name__ == "__main__":
    B, S, D = 2, 8, 32

    key = jax.random.PRNGKey(0)
    t = jax.random.uniform(key, (B, S), dtype=jnp.float32) * 100.0  # timestamps
    w, b = make_time_encode_params(D)

    # Bias path (bias is zeros, matching the module init).
    out = jax.block_until_ready(time_encode(t, w, b))
    ref = jnp.cos(t[:, :, None] * w[None, None, :] + b[None, None, :])
    np.testing.assert_allclose(np.asarray(out), np.asarray(ref), rtol=1e-6, atol=1e-6)
    assert out.shape == (B, S, D)

    # No-bias fast path; exercises a multi-step grid with a partial trailing block
    # (1000 rows, 64-row tiles) and the no-slice path (N % (8*pack) == 0).
    B2, S2 = 4, 1000
    t2 = jax.random.uniform(jax.random.PRNGKey(1), (B2, S2), dtype=jnp.float32) * 100.0
    out2 = jax.block_until_ready(time_encode(t2, w, tile_rows=64))
    ref2 = jnp.cos(t2[:, :, None] * w[None, None, :])
    np.testing.assert_allclose(np.asarray(out2), np.asarray(ref2), rtol=1e-6, atol=1e-6)
    assert out2.shape == (B2, S2, D)

    # D that does not divide 128: generalized packing (pack = 128/gcd(D,128) = 8).
    D3 = 48
    w3, b3 = make_time_encode_params(D3)
    t3 = jax.random.uniform(jax.random.PRNGKey(2), (B, S), dtype=jnp.float32) * 100.0
    out3 = jax.block_until_ready(time_encode(t3, w3, b3))
    ref3 = jnp.cos(t3[:, :, None] * w3[None, None, :] + b3[None, None, :])
    np.testing.assert_allclose(np.asarray(out3), np.asarray(ref3), rtol=1e-6, atol=1e-6)
    assert out3.shape == (B, S, D3)

    print("KERNEL_OK")
</pallas_src>

<mosaic_0001>
module attributes {stable_mosaic.version = 11 : i64} {
  func.func @_time_encode_bias_kernel(%arg0: i32, %arg1: memref<8x4xf32, #tpu.memory_space<vmem>>, %arg2: memref<4x128xf32, #tpu.memory_space<vmem>>, %arg3: memref<1x128xf32, #tpu.memory_space<vmem>>, %arg4: memref<8x128xf32, #tpu.memory_space<vmem>>) attributes {dimension_semantics = [#tpu.dimension_semantics<parallel>], iteration_bounds = array<i64: 1>, scalar_prefetch = 0 : i64, scratch_operands = 0 : i64, tpu.core_type = #tpu.core_type<tc>, window_params = [{transform_indices = @transform_0, window_bounds = array<i64: 8, 4>}, {pipeline_mode = #tpu.pipeline_mode<synchronous>, transform_indices = @transform_1, window_bounds = array<i64: 4, 128>}, {pipeline_mode = #tpu.pipeline_mode<synchronous>, transform_indices = @transform_2, window_bounds = array<i64: 1, 128>}, {transform_indices = @transform_3, window_bounds = array<i64: 8, 128>}]} {
    %c0 = arith.constant 0 : index
    %c0_0 = arith.constant 0 : index
    %0 = vector.load %arg1[%c0, %c0_0] : memref<8x4xf32, #tpu.memory_space<vmem>>, vector<8x4xf32>
    %c0_1 = arith.constant 0 : index
    %c0_2 = arith.constant 0 : index
    %1 = vector.load %arg2[%c0_1, %c0_2] : memref<4x128xf32, #tpu.memory_space<vmem>>, vector<4x128xf32>
    %c0_3 = arith.constant 0 : index
    %c0_4 = arith.constant 0 : index
    %2 = vector.load %arg3[%c0_3, %c0_4] : memref<1x128xf32, #tpu.memory_space<vmem>>, vector<1x128xf32>
    %3 = vector.extract_strided_slice %0 {offsets = [0, 0], sizes = [8, 1], strides = [1, 1]} : vector<8x4xf32> to vector<8x1xf32>
    %4 = vector.extract_strided_slice %1 {offsets = [0, 0], sizes = [1, 128], strides = [1, 1]} : vector<4x128xf32> to vector<1x128xf32>
    %5 = vector.broadcast %3 : vector<8x1xf32> to vector<8x128xf32>
    %6 = vector.broadcast %4 : vector<1x128xf32> to vector<8x128xf32>
    %7 = arith.mulf %5, %6 : vector<8x128xf32>
    %8 = vector.broadcast %2 : vector<1x128xf32> to vector<8x128xf32>
    %9 = arith.addf %8, %7 : vector<8x128xf32>
    %10 = vector.extract_strided_slice %0 {offsets = [0, 1], sizes = [8, 1], strides = [1, 1]} : vector<8x4xf32> to vector<8x1xf32>
    %11 = vector.extract_strided_slice %1 {offsets = [1, 0], sizes = [1, 128], strides = [1, 1]} : vector<4x128xf32> to vector<1x128xf32>
    %12 = vector.broadcast %10 : vector<8x1xf32> to vector<8x128xf32>
    %13 = vector.broadcast %11 : vector<1x128xf32> to vector<8x128xf32>
    %14 = arith.mulf %12, %13 : vector<8x128xf32>
    %15 = arith.addf %9, %14 : vector<8x128xf32>
    %16 = vector.extract_strided_slice %0 {offsets = [0, 2], sizes = [8, 1], strides = [1, 1]} : vector<8x4xf32> to vector<8x1xf32>
    %17 = vector.extract_strided_slice %1 {offsets = [2, 0], sizes = [1, 128], strides = [1, 1]} : vector<4x128xf32> to vector<1x128xf32>
    %18 = vector.broadcast %16 : vector<8x1xf32> to vector<8x128xf32>
    %19 = vector.broadcast %17 : vector<1x128xf32> to vector<8x128xf32>
    %20 = arith.mulf %18, %19 : vector<8x128xf32>
    %21 = arith.addf %15, %20 : vector<8x128xf32>
    %22 = vector.extract_strided_slice %0 {offsets = [0, 3], sizes = [8, 1], strides = [1, 1]} : vector<8x4xf32> to vector<8x1xf32>
    %23 = vector.extract_strided_slice %1 {offsets = [3, 0], sizes = [1, 128], strides = [1, 1]} : vector<4x128xf32> to vector<1x128xf32>
    %24 = vector.broadcast %22 : vector<8x1xf32> to vector<8x128xf32>
    %25 = vector.broadcast %23 : vector<1x128xf32> to vector<8x128xf32>
    %26 = arith.mulf %24, %25 : vector<8x128xf32>
    %27 = arith.addf %21, %26 : vector<8x128xf32>
    %28 = math.cos %27 : vector<8x128xf32>
    %c0_5 = arith.constant 0 : index
    %c0_6 = arith.constant 0 : index
    %29 = vector.load %arg4[%c0_5, %c0_6] : memref<8x128xf32, #tpu.memory_space<vmem>>, vector<8x128xf32>
    tpu.vector_store %arg4[%c0_5, %c0_6], %28 {strides = array<i32>} : memref<8x128xf32, #tpu.memory_space<vmem>>, vector<8x128xf32>,
    return
  }
  func.func @transform_0(%arg0: i32) -> (i32, i32) {
    %c0_i32 = arith.constant 0 : i32
    %c0_i32_0 = arith.constant 0 : i32
    return %arg0, %c0_i32 : i32, i32
  }
  func.func @transform_1(%arg0: i32) -> (i32, i32) {
    %c0_i32 = arith.constant 0 : i32
    %c0_i32_0 = arith.constant 0 : i32
    %c0_i32_1 = arith.constant 0 : i32
    return %c0_i32, %c0_i32_0 : i32, i32
  }
  func.func @transform_2(%arg0: i32) -> (i32, i32) {
    %c0_i32 = arith.constant 0 : i32
    %c0_i32_0 = arith.constant 0 : i32
    %c0_i32_1 = arith.constant 0 : i32
    return %c0_i32, %c0_i32_0 : i32, i32
  }
  func.func @transform_3(%arg0: i32) -> (i32, i32) {
    %c0_i32 = arith.constant 0 : i32
    %c0_i32_0 = arith.constant 0 : i32
    return %arg0, %c0_i32 : i32, i32
  }
}

</mosaic_0001>

<llo_original>
// kernel: tpu_custom_call.1
$region0: #{tpu_custom_call.1}
  #allocation0 [shape = 'u32[]', space=smem, size = 0x4, offset = 0x4, fixed_abs, tag = 'smem constant byte address 0x4 - core index']
  #allocation1 [shape = 'u32[144,128]{1,0:T(1,128)}', space=vmem, size = 0x12000, scoped, tag = 'internal scratch']
  %s0 = inlined_call_operand.vmem [shape: f32[8,4], index: 0, kind: input, shape index: {}]
  %s1 = inlined_call_operand.vmem [shape: f32[4,128], index: 1, kind: input, shape index: {}]
  %s2 = inlined_call_operand.vmem [shape: f32[1,128], index: 2, kind: input, shape index: {}]
  %s3 = inlined_call_operand.hbm [shape: f32[8,128], index: 3, kind: output, shape index: {}]
  %s4 = sld [smem:[#allocation0]]
  $region22: #{tpu_custom_call.1} parent=0
    _
  %s6 = ssub.s32 1, %s4
  %s7 = scalar_select 0, %s6, %s4
  $region1: #{tpu_custom_call.1} parent=0
    #allocation2 [shape = 'u8[4096]{0}', space=vmem, size = 0x1000, scoped, tag = 'output window, operand 0, single buffered']
    #allocation3 [shape = 's32[1]{0}', space=sflag, size = 0x4, scoped, tag = 'scoped memory for tpu_custom_call.1']
    %8 = vsyncpa [#allocation3], 0
    // Predicated region
    $region2: #{tpu_custom_call.1} parent=1 // pred_check
      _
    $region3: #{tpu_custom_call.1} parent=1 // pred_check_branch
      %10 = sbr.rel (0) target = $region5
    $region4: #{tpu_custom_call.1} parent=1 // pred_region
      _
    $region5: #{tpu_custom_call.1} parent=1 // pred_fallthru
      _
    // Predicated region
    $region6: #{tpu_custom_call.1} parent=1 // pred_check
      _
    $region7: #{tpu_custom_call.1} parent=1 // pred_check_branch
      %12 = sbr.rel (0) target = $region9
    $region8: #{tpu_custom_call.1} parent=1 // pred_region
      _
    $region9: #{tpu_custom_call.1} parent=1 // pred_fallthru
      _
    // Predicated region
    $region10: #{tpu_custom_call.1} parent=1 // pred_check
      _
    $region11: #{tpu_custom_call.1} parent=1 // pred_check_branch
      %14 = sbr.rel (0) target = $region13
    $region12: #{tpu_custom_call.1} parent=1 // pred_region
      _
    $region13: #{tpu_custom_call.1} parent=1 // pred_fallthru
      _
    %v15 = vld [vmem:[%s0] sm:$0xff]
    %v16 = vld [vmem:[%s1] sm:$0xf]
    %v17 = vld [vmem:[%s2] sm:$0x1]
    %19 = vset.pattern.permute.xlu0 0
    %20 = vperm.xlu0 %19, %v15
    %v21 = vpop.permute.xlu0 %20
    %v23 = vlaneseq
    %v24 = vshrl.u32 %v23, 7
    %v25 = vsub.s32 0, %v24
    %v26 = vrot.slane %v16, %v25
    %v27 = vmul.f32 %v21, %v26
    %v29 = vlaneseq
    %v30 = vshrl.u32 %v29, 7
    %v31 = vsub.s32 0, %v30
    %v32 = vrot.slane %v17, %v31
    %v34 = vadd.f32 %v32, %v27
    %35 = vset.pattern.permute.xlu0 1
    %36 = vperm.xlu0 %35, %v15
    %v37 = vpop.permute.xlu0 %36
    %v39 = vlaneseq
    %v40 = vshrl.u32 %v39, 7
    %v41 = vsub.s32 1, %v40
    %v42 = vrot.slane %v16, %v41
    %v43 = vmul.f32 %v37, %v42
    %v44 = vadd.f32 %v34, %v43
    %45 = vset.pattern.permute.xlu0 2
    %46 = vperm.xlu0 %45, %v15
    %v47 = vpop.permute.xlu0 %46
    %v49 = vlaneseq
    %v50 = vshrl.u32 %v49, 7
    %v51 = vsub.s32 2, %v50
    %v52 = vrot.slane %v16, %v51
    %v53 = vmul.f32 %v47, %v52
    %v54 = vadd.f32 %v44, %v53
    %55 = vset.pattern.permute.xlu0 3
    %56 = vperm.xlu0 %55, %v15
    %v57 = vpop.permute.xlu0 %56
    %v59 = vlaneseq
    %v60 = vshrl.u32 %v59, 7
    %v61 = vsub.s32 3, %v60
    %v62 = vrot.slane %v16, %v61
    %v63 = vmul.f32 %v57, %v62
    %v64 = vadd.f32 %v54, %v63
    %v65 = vand.u32 2147483647, %v64
    %vm66 = vcmp.le.f32.partialorder %v65, 0.7853982
    %vm67 = vcmp.lt.s32.totalorder %v64, 0
    %v68 = vand.u32 %v64, 2139095040
    %v69 = vshrl.u32 %v68, 23
    %v70 = vsub.s32 %v69, 127
    %v71 = vand.u32 2147483647, %v64
    %v72 = vand.u32 %v71, 8388607
    %v73 = vor.u32 %v72, 8388608
    %v74 = vsub.s32 0, %v73
    %v75 = vadd.s32 %v70, 1
    %vm76 = vcmp.gt.s32.totalorder %v75, 0
    %v77 = vsel %vm76, %v75, 0
    %v78 = vshrl.u32 %v77, 5
    %v79 = vand.u32 %v77, 31
    %v80 = vsub.s32 32, %v79
    %v81 = vshrl.u32 683565275, %v80
    %v82 = vshll.u32 683565275, %v79
    %v83 = vshrl.u32 2475754826, %v80
    %v84 = vor.u32 %v82, %v83
    %v85 = vshll.u32 2475754826, %v79
    %v86 = vshrl.u32 2131351028, %v80
    %v87 = vor.u32 %v85, %v86
    %v88 = vshll.u32 2131351028, %v79
    %v89 = vshrl.u32 2102212464, %v80
    %v90 = vor.u32 %v88, %v89
    %v91 = vshll.u32 2102212464, %v79
    %v92 = vshrl.u32 920167782, %v80
    %v93 = vor.u32 %v91, %v92
    %v94 = vshll.u32 920167782, %v79
    %v95 = vshrl.u32 1326507024, %v80
    %v96 = vor.u32 %v94, %v95
    %vm97 = vcmp.lt.s32.totalorder %v78, 1
    %vm98 = vcmp.lt.s32.totalorder %v78, 2
    %vm99 = vcmp.lt.s32.totalorder %v78, 3
    %vm100 = vcmp.lt.s32.totalorder %v78, 4
    %v101 = vsel %vm97, %v81, %v84
    %v102 = vsel %vm100, %v90, 2102212464
    %v103 = vsel %vm99, %v87, %v102
    %v104 = vsel %vm98, %v101, %v103
    %v105 = vsel %vm97, %v84, %v87
    %v106 = vsel %vm100, %v93, 920167782
    %v107 = vsel %vm99, %v90, %v106
    %v108 = vsel %vm98, %v105, %v107
    %v109 = vsel %vm97, %v87, %v90
    %v110 = vsel %vm100, %v96, 1326507024
    %v111 = vsel %vm99, %v93, %v110
    %v112 = vsel %vm98, %v109, %v111
    %v113 = vshll.u32 %v73, 8
    %v114 = vmul.u32.u64.compose %v113, %v112
    %v115 = vextract.low.u32 %v114
    %v116 = vextract.high.u32 %v114
    %v117 = vmul.u32.u64.compose %v113, %v108
    %v118 = vextract.low.u32 %v117
    %v119 = vextract.high.u32 %v117
    %v120 = vmul.u32 %v113, %v104
    %v121 = vadd.s32 %v116, %v118
    %vm122 = vc.u32 %v116, %v118
    %v123 = vadd.s32 %v119, 1
    %v124 = vsel %vm122, %v123, %v119
    %v125 = vadd.s32 %v120, %v124
    %v126 = vadd.s32 %v125, 536870912
    %v127 = vshrl.u32 %v126, 30
    %v128 = vshll.u32 %v127, 30
    %v129 = vsub.s32 %v125, %v128
    %vm130 = vcmp.lt.s32.totalorder %v129, 0
    %v131 = vsub.s32 0, %v129
    %v132 = vsel %vm130, %v131, %v129
    %v133 = vclz %v132
    %v134 = vsub.s32 %v133, 2
    %vm135 = vcmp.gt.s32.totalorder 0, %v134
    %v136 = vsel %vm135, 0, %v134
    %v137 = vsub.s32 32, %v136
    %v138 = vshll.u32 %v129, %v136
    %v139 = vshrl.u32 %v121, %v137
    %v140 = vor.u32 %v138, %v139
    %v141 = vsub.s32 4294967266, %v136
    %v142 = vadd.s32 %v141, 127
    %v143 = vshll.u32 %v142, 23
    %v144 = vor.u32 4788187, %v143
    %v145 = vand.u32 2147483647, %v144
    %v147 = vcvt.s32.f32 %v140
    %v148 = vmul.f32 %v147, %v145
    %v149 = vxor.u32 %v148, 2147483648
    %v150 = vsel %vm67, %v149, %v148
    %v151 = vsub.s32 4, %v127
    %v152 = vsel %vm67, %v151, %v127
    %v153 = vsel %vm66, %v64, %v150
    %v154 = vsel %vm66, 0, %v152
    %v155 = vcosq.f32.pop %v153
    %v156 = vsinq.f32.pop %v153
    %vm157 = vweird.f32 %v64
    %v158 = vand.u32 %v154, 3
    %vm159 = vcmp.lt.s32.totalorder %v158, 2
    %vm160 = vcmp.eq.s32.totalorder %v158, 0
    %v161 = vxor.u32 %v156, 2147483648
    %v162 = vsel %vm160, %v155, %v161
    %vm163 = vcmp.eq.s32.totalorder %v158, 2
    %v164 = vxor.u32 %v155, 2147483648
    %v165 = vsel %vm163, %v164, %v156
    %v166 = vsel %vm159, %v162, %v165
    %v167 = vsel %vm157, nan, %v166
    %168 = vst [vmem:[#allocation2] sm:$0xff] %v167
    // Predicated region
    $region14: #{tpu_custom_call.1} parent=1 // pred_check
      _
    $region15: #{tpu_custom_call.1} parent=1 // pred_check_branch
      %170 = sbr.rel (0) target = $region17
    $region16: #{tpu_custom_call.1} parent=1 // pred_region
      %s172 = ssub.s32 128, 128
      %173 = vsyncadd [#allocation3], %s172
      %s175 = sshll.u32 [#allocation2], 4
      %s176 = int_to_ptr.vmem [resolvable:$true] %s175
      %178 = dma.vmem_to_hbm [thread:$0]  %s176, 128, %s3, [#allocation3]
    $region17: #{tpu_custom_call.1} parent=1 // pred_fallthru
      _
    // Predicated region
    $region18: #{tpu_custom_call.1} parent=1 // pred_check
      _
    $region19: #{tpu_custom_call.1} parent=1 // pred_check_branch
      %180 = sbr.rel (0) target = $region21
    $region20: #{tpu_custom_call.1} parent=1 // pred_region
      %181 = dma.done [#allocation3], 128
    $region21: #{tpu_custom_call.1} parent=1 // pred_fallthru
      _
    %182 = vsyncpa [#allocation3], 1

</llo_original>
